<compile_context>
chip_gen: v7x
topology: tpu7x:2x2x1
jax: 0.10.0
libtpu: 0.0.40
codegen_flags: <defaults>
</compile_context>

<pallas_src>
import jax
import jax.numpy as jnp
from jax.experimental import pallas as pl
from jax.experimental.pallas import tpu as pltpu


def _mlp_kernel(xt_ref, w1t_ref, b1_ref, w2_ref, b2_ref, o_ref):
    # Lane-dense transposed layout:
    #   xt:  (F, TN)   w1t: (H, F)   b1: (H, 1)   w2: (H, O)   b2: (O, 1)
    #   out: (O, TN)
    xt = xt_ref[...]
    w1t = w1t_ref[...]
    n_feature = xt.shape[0]

    if n_feature == 1:
        # K=1 contraction -> broadcast outer product on the VPU (skip MXU).
        h = w1t * xt                                   # (H,1)*(1,TN) -> (H,TN)
    else:
        h = jnp.dot(w1t, xt, preferred_element_type=jnp.float32)
    h = jnp.maximum(h + b1_ref[...], 0.0)              # (H, TN)

    w2 = w2_ref[...]                                   # (H, O)
    n_output = w2.shape[1]
    if n_output == 1:
        # N_out=1 contraction -> elementwise mul + sublane reduce (VPU/XLU).
        y = jnp.sum(w2 * h, axis=0, keepdims=True)     # (1, TN)
    else:
        # Contract over H without an in-kernel transpose: (H,O) x (H,TN) -> (O,TN)
        y = jax.lax.dot_general(
            w2, h,
            dimension_numbers=(((0,), (0,)), ((), ())),
            preferred_element_type=jnp.float32)
    o_ref[...] = (y + b2_ref[...]).astype(o_ref.dtype)


def net_forward(x, w1, b1, w2, b2, *, block_n=512):
    """Forward pass of Net.

    x:  (N, n_feature)
    w1: (n_feature, n_hidden)   b1: (1, n_hidden) or (n_hidden,)
    w2: (n_hidden, n_output)    b2: (1, n_output) or (n_output,)
    Returns (N, n_output) float32.
    """
    n, n_feature = x.shape
    n_hidden = w1.shape[1]
    n_output = w2.shape[1]

    # Host-side layout plumbing (no extra compute inside the kernel):
    xt = jnp.asarray(x, jnp.float32).T                         # (F, N)
    w1t = jnp.asarray(w1, jnp.float32).T                       # (H, F)
    b1c = jnp.asarray(b1, jnp.float32).reshape(n_hidden, 1)    # (H, 1)
    w2c = jnp.asarray(w2, jnp.float32)                         # (H, O)
    b2c = jnp.asarray(b2, jnp.float32).reshape(n_output, 1)    # (O, 1)

    vmem = pl.BlockSpec(memory_space=pltpu.MemorySpace.VMEM)

    if n > block_n and n % block_n == 0:
        # Lane-tiled batch grid: double-buffered pipelining of the batch
        # stream; weights stay resident (block index (0, 0) every step).
        grid = (n // block_n,)
        in_specs = [
            pl.BlockSpec((n_feature, block_n), lambda i: (0, i)),
            pl.BlockSpec((n_hidden, n_feature), lambda i: (0, 0)),
            pl.BlockSpec((n_hidden, 1), lambda i: (0, 0)),
            pl.BlockSpec((n_hidden, n_output), lambda i: (0, 0)),
            pl.BlockSpec((n_output, 1), lambda i: (0, 0)),
        ]
        out_specs = pl.BlockSpec((n_output, block_n), lambda i: (0, i))
        compiler_params = pltpu.CompilerParams(
            dimension_semantics=("parallel",))
    else:
        # Tiny problem: single invocation, everything resident in VMEM.
        grid = ()
        in_specs = [vmem, vmem, vmem, vmem, vmem]
        out_specs = vmem
        compiler_params = pltpu.CompilerParams()

    yt = pl.pallas_call(
        _mlp_kernel,
        out_shape=jax.ShapeDtypeStruct((n_output, n), jnp.float32),
        grid=grid,
        in_specs=in_specs,
        out_specs=out_specs,
        compiler_params=compiler_params,
    )(xt, w1t, b1c, w2c, b2c)

    return yt.T                                                # (N, O)


def init_params(key, n_feature, n_hidden, n_output):
    """Deterministic init mimicking torch.nn.Linear default:
    U(-1/sqrt(fan_in), 1/sqrt(fan_in)); weights stored as (in, out)."""
    k1, k2, k3, k4 = jax.random.split(key, 4)
    bound1 = 1.0 / jnp.sqrt(jnp.float32(n_feature))
    bound2 = 1.0 / jnp.sqrt(jnp.float32(n_hidden))
    w1 = jax.random.uniform(k1, (n_feature, n_hidden), jnp.float32, -bound1, bound1)
    b1 = jax.random.uniform(k2, (1, n_hidden), jnp.float32, -bound1, bound1)
    w2 = jax.random.uniform(k3, (n_hidden, n_output), jnp.float32, -bound2, bound2)
    b2 = jax.random.uniform(k4, (1, n_output), jnp.float32, -bound2, bound2)
    return w1, b1, w2, b2


if __name__ == "__main__":
    # Shapes implied by the original script: x = linspace(-1, 1, 100)[:, None]
    # i.e. N=100, n_feature=1; pick n_hidden=32, n_output=1.
    N, n_feature, n_hidden, n_output = 100, 1, 32, 1

    key = jax.random.PRNGKey(0)
    x = jnp.linspace(-1.0, 1.0, N, dtype=jnp.float32).reshape(N, n_feature)
    w1, b1, w2, b2 = init_params(key, n_feature, n_hidden, n_output)

    # Small-batch (single-invocation, all-VMEM) path.
    y = jax.block_until_ready(net_forward(x, w1, b1, w2, b2))
    y_ref = jnp.maximum(x @ w1 + b1, 0.0) @ w2 + b2
    assert y.shape == (N, n_output)
    assert jnp.allclose(y, y_ref, atol=1e-5, rtol=1e-5)

    # Larger batch exercises the lane-tiled, double-buffered grid path.
    N2 = 2048
    x2 = jnp.linspace(-1.0, 1.0, N2, dtype=jnp.float32).reshape(N2, n_feature)
    y2 = jax.block_until_ready(net_forward(x2, w1, b1, w2, b2))
    y2_ref = jnp.maximum(x2 @ w1 + b1, 0.0) @ w2 + b2
    assert y2.shape == (N2, n_output)
    assert jnp.allclose(y2, y2_ref, atol=1e-5, rtol=1e-5)

    print("KERNEL_OK")
</pallas_src>

<mosaic_0001>
module attributes {stable_mosaic.version = 11 : i64} {
  func.func @_mlp_kernel(%arg0: memref<1x100xf32, #tpu.memory_space<vmem>>, %arg1: memref<32x1xf32, #tpu.memory_space<vmem>>, %arg2: memref<32x1xf32, #tpu.memory_space<vmem>>, %arg3: memref<32x1xf32, #tpu.memory_space<vmem>>, %arg4: memref<1x1xf32, #tpu.memory_space<vmem>>, %arg5: memref<1x100xf32, #tpu.memory_space<vmem>>) attributes {dimension_semantics = [], scalar_prefetch = 0 : i64, scratch_operands = 0 : i64, tpu.core_type = #tpu.core_type<tc>} {
    %c0 = arith.constant 0 : index
    %c0_0 = arith.constant 0 : index
    %0 = vector.load %arg0[%c0, %c0_0] : memref<1x100xf32, #tpu.memory_space<vmem>>, vector<1x100xf32>
    %c0_1 = arith.constant 0 : index
    %c0_2 = arith.constant 0 : index
    %1 = vector.load %arg1[%c0_1, %c0_2] : memref<32x1xf32, #tpu.memory_space<vmem>>, vector<32x1xf32>
    %2 = vector.broadcast %1 : vector<32x1xf32> to vector<32x100xf32>
    %3 = vector.broadcast %0 : vector<1x100xf32> to vector<32x100xf32>
    %4 = arith.mulf %2, %3 : vector<32x100xf32>
    %c0_3 = arith.constant 0 : index
    %c0_4 = arith.constant 0 : index
    %5 = vector.load %arg2[%c0_3, %c0_4] : memref<32x1xf32, #tpu.memory_space<vmem>>, vector<32x1xf32>
    %6 = vector.broadcast %5 : vector<32x1xf32> to vector<32x100xf32>
    %7 = arith.addf %4, %6 : vector<32x100xf32>
    %cst = arith.constant 0.000000e+00 : f32
    %8 = vector.broadcast %cst : f32 to vector<32x100xf32>
    %9 = arith.maximumf %7, %8 : vector<32x100xf32>
    %c0_5 = arith.constant 0 : index
    %c0_6 = arith.constant 0 : index
    %10 = vector.load %arg3[%c0_5, %c0_6] : memref<32x1xf32, #tpu.memory_space<vmem>>, vector<32x1xf32>
    %11 = vector.broadcast %10 : vector<32x1xf32> to vector<32x100xf32>
    %12 = arith.mulf %11, %9 : vector<32x100xf32>
    %cst_7 = arith.constant dense<0.000000e+00> : vector<100xf32>
    %13 = vector.multi_reduction <add>, %12, %cst_7 [0] : vector<32x100xf32> to vector<100xf32>
    %14 = vector.shape_cast %13 : vector<100xf32> to vector<1x100xf32>
    %c0_8 = arith.constant 0 : index
    %c0_9 = arith.constant 0 : index
    %15 = vector.load %arg4[%c0_8, %c0_9] : memref<1x1xf32, #tpu.memory_space<vmem>>, vector<1x1xf32>
    %16 = vector.broadcast %15 : vector<1x1xf32> to vector<1x100xf32>
    %17 = arith.addf %14, %16 : vector<1x100xf32>
    %c0_10 = arith.constant 0 : index
    %c0_11 = arith.constant 0 : index
    %18 = vector.load %arg5[%c0_10, %c0_11] : memref<1x100xf32, #tpu.memory_space<vmem>>, vector<1x100xf32>
    tpu.vector_store %arg5[%c0_10, %c0_11], %17 {strides = array<i32>} : memref<1x100xf32, #tpu.memory_space<vmem>>, vector<1x100xf32>,
    return
  }
}

</mosaic_0001>

<llo_original>
// kernel: tpu_custom_call.1
$region0: #{tpu_custom_call.1}
  #allocation0 [shape = 'u32[]', space=smem, size = 0x4, offset = 0x4, fixed_abs, tag = 'smem constant byte address 0x4 - core index']
  #allocation1 [shape = 'u32[144,128]{1,0:T(1,128)}', space=vmem, size = 0x12000, scoped, tag = 'internal scratch']
  #allocation2 [shape = 'f32[1,1]{1,0:T(1,128)S(1)}', space=vmem, size = 0x200, scoped, tag = 'scoped memory for tpu_custom_call.1']
  %s0 = inlined_call_operand.vmem [shape: f32[1,100], index: 0, kind: input, shape index: {}]
  %s1 = inlined_call_operand.vmem [shape: f32[32,1], index: 1, kind: input, shape index: {}]
  %s2 = inlined_call_operand.vmem [shape: f32[32,1], index: 2, kind: input, shape index: {}]
  %s3 = inlined_call_operand.vmem [shape: f32[32,1], index: 3, kind: input, shape index: {}]
  %s4 = inlined_call_operand.<no memory space> [shape: f32[1,1], index: 4, kind: input, shape index: {}]
  %s5 = inlined_call_operand.hbm [shape: f32[1,100], index: 5, kind: output, shape index: {}]
  %s6 = sld [smem:[#allocation0]]
  $region30: #{tpu_custom_call.1} parent=0
    _
  %s8 = ssub.s32 1, %s6
  %s9 = scalar_select 0, %s8, %s6
  %v10 = vstv %s4
  %11 = vst [vmem:[#allocation2] sm:$0x1] %v10
  $region1: #{tpu_custom_call.1} parent=0
    #allocation3 [shape = 'u8[512]{0}', space=vmem, size = 0x400, scoped, tag = 'output window, operand 0, single buffered']
    #allocation4 [shape = 's32[1]{0}', space=sflag, size = 0x4, scoped, tag = 'scoped memory for tpu_custom_call.1']
    %12 = vsyncpa [#allocation4], 0
    // Predicated region
    $region2: #{tpu_custom_call.1} parent=1 // pred_check
      _
    $region3: #{tpu_custom_call.1} parent=1 // pred_check_branch
      %14 = sbr.rel (0) target = $region5
    $region4: #{tpu_custom_call.1} parent=1 // pred_region
      _
    $region5: #{tpu_custom_call.1} parent=1 // pred_fallthru
      _
    // Predicated region
    $region6: #{tpu_custom_call.1} parent=1 // pred_check
      _
    $region7: #{tpu_custom_call.1} parent=1 // pred_check_branch
      %16 = sbr.rel (0) target = $region9
    $region8: #{tpu_custom_call.1} parent=1 // pred_region
      _
    $region9: #{tpu_custom_call.1} parent=1 // pred_fallthru
      _
    // Predicated region
    $region10: #{tpu_custom_call.1} parent=1 // pred_check
      _
    $region11: #{tpu_custom_call.1} parent=1 // pred_check_branch
      %18 = sbr.rel (0) target = $region13
    $region12: #{tpu_custom_call.1} parent=1 // pred_region
      _
    $region13: #{tpu_custom_call.1} parent=1 // pred_fallthru
      _
    // Predicated region
    $region14: #{tpu_custom_call.1} parent=1 // pred_check
      _
    $region15: #{tpu_custom_call.1} parent=1 // pred_check_branch
      %20 = sbr.rel (0) target = $region17
    $region16: #{tpu_custom_call.1} parent=1 // pred_region
      _
    $region17: #{tpu_custom_call.1} parent=1 // pred_fallthru
      _
    // Predicated region
    $region18: #{tpu_custom_call.1} parent=1 // pred_check
      _
    $region19: #{tpu_custom_call.1} parent=1 // pred_check_branch
      %22 = sbr.rel (0) target = $region21
    $region20: #{tpu_custom_call.1} parent=1 // pred_region
      _
    $region21: #{tpu_custom_call.1} parent=1 // pred_fallthru
      _
    %v23 = vld [vmem:[%s0] sm:$0x1]
    %v24 = vld [vmem:[%s1] sm:$0xff]
    %v25 = vld [vmem:[%s1 + $0x8] sm:$0xff]
    %v26 = vld [vmem:[%s1 + $0x10] sm:$0xff]
    %v27 = vld [vmem:[%s1 + $0x18] sm:$0xff]
    %29 = vset.pattern.permute.xlu0 0
    %30 = vperm.xlu0 %29, %v24
    %v31 = vpop.permute.xlu0 %30
    %34 = vset.pattern.permute.xlu0 0
    %35 = vperm.xlu0 %34, %v25
    %v36 = vpop.permute.xlu0 %35
    %39 = vset.pattern.permute.xlu0 0
    %40 = vperm.xlu0 %39, %v26
    %v41 = vpop.permute.xlu0 %40
    %44 = vset.pattern.permute.xlu0 0
    %45 = vperm.xlu0 %44, %v27
    %v46 = vpop.permute.xlu0 %45
    %v49 = vlaneseq
    %v50 = vshrl.u32 %v49, 7
    %v51 = vsub.s32 0, %v50
    %v52 = vrot.slane %v23, %v51
    %v54 = vmul.f32 %v31, %v52
    %v55 = vmul.f32 %v36, %v52
    %v56 = vmul.f32 %v41, %v52
    %v57 = vmul.f32 %v46, %v52
    %v58 = vld [vmem:[%s2] sm:$0xff]
    %v59 = vld [vmem:[%s2 + $0x8] sm:$0xff]
    %v60 = vld [vmem:[%s2 + $0x10] sm:$0xff]
    %v61 = vld [vmem:[%s2 + $0x18] sm:$0xff]
    %63 = vset.pattern.permute.xlu0 0
    %64 = vperm.xlu0 %63, %v58
    %v65 = vpop.permute.xlu0 %64
    %68 = vset.pattern.permute.xlu0 0
    %69 = vperm.xlu0 %68, %v59
    %v70 = vpop.permute.xlu0 %69
    %73 = vset.pattern.permute.xlu0 0
    %74 = vperm.xlu0 %73, %v60
    %v75 = vpop.permute.xlu0 %74
    %78 = vset.pattern.permute.xlu0 0
    %79 = vperm.xlu0 %78, %v61
    %v80 = vpop.permute.xlu0 %79
    %v82 = vadd.f32 %v54, %v65
    %v83 = vadd.f32 %v55, %v70
    %v84 = vadd.f32 %v56, %v75
    %v85 = vadd.f32 %v57, %v80
    %v86 = vmax.f32 %v82, 0.0
    %v87 = vmax.f32 %v83, 0.0
    %v88 = vmax.f32 %v84, 0.0
    %v89 = vmax.f32 %v85, 0.0
    %v90 = vld [vmem:[%s3] sm:$0xff]
    %v91 = vld [vmem:[%s3 + $0x8] sm:$0xff]
    %v92 = vld [vmem:[%s3 + $0x10] sm:$0xff]
    %v93 = vld [vmem:[%s3 + $0x18] sm:$0xff]
    %95 = vset.pattern.permute.xlu0 0
    %96 = vperm.xlu0 %95, %v90
    %v97 = vpop.permute.xlu0 %96
    %100 = vset.pattern.permute.xlu0 0
    %101 = vperm.xlu0 %100, %v91
    %v102 = vpop.permute.xlu0 %101
    %105 = vset.pattern.permute.xlu0 0
    %106 = vperm.xlu0 %105, %v92
    %v107 = vpop.permute.xlu0 %106
    %110 = vset.pattern.permute.xlu0 0
    %111 = vperm.xlu0 %110, %v93
    %v112 = vpop.permute.xlu0 %111
    %v114 = vmul.f32 %v97, %v86
    %v115 = vmul.f32 %v102, %v87
    %v116 = vmul.f32 %v107, %v88
    %v117 = vmul.f32 %v112, %v89
    %vm118 = vcmask 818176
    %v119 = vsel %vm118, %v114, 0.0
    %v120 = vsel %vm118, %v115, 0.0
    %v121 = vadd.f32 %v119, %v120
    %v122 = vsel %vm118, %v116, 0.0
    %v123 = vadd.f32 %v121, %v122
    %v124 = vsel %vm118, %v117, 0.0
    %v125 = vadd.f32 %v123, %v124
    %v126 = vrot.slane %v125, 4
    %v127 = vadd.f32 %v125, %v126
    %v128 = vrot.slane %v127, 2
    %v129 = vadd.f32 %v127, %v128
    %v130 = vrot.slane %v129, 1
    %v131 = vadd.f32 %v129, %v130
    %v132 = vld [vmem:[#allocation2] sm:$0x1]
    %134 = vset.pattern.permute.xlu0 0
    %135 = vperm.xlu0 %134, %v132
    %v136 = vpop.permute.xlu0 %135
    %v138 = vlaneseq
    %v139 = vshrl.u32 %v138, 7
    %v140 = vsub.s32 0, %v139
    %v141 = vrot.slane %v136, %v140
    %v142 = vadd.f32 %v131, %v141
    %vm143 = vcmask 811008
    %144 = vst.msk [vmem:[#allocation3] sm:$0x1] %vm143, %v142
    // Predicated region
    $region22: #{tpu_custom_call.1} parent=1 // pred_check
      _
    $region23: #{tpu_custom_call.1} parent=1 // pred_check_branch
      %146 = sbr.rel (0) target = $region25
    $region24: #{tpu_custom_call.1} parent=1 // pred_region
      %s148 = ssub.s32 16, 16
      %149 = vsyncadd [#allocation4], %s148
      %s151 = sshll.u32 [#allocation3], 4
      %s152 = int_to_ptr.vmem [resolvable:$true] %s151
      %154 = dma.vmem_to_hbm [thread:$0]  %s152, 16, %s5, [#allocation4]
    $region25: #{tpu_custom_call.1} parent=1 // pred_fallthru
      _
    // Predicated region
    $region26: #{tpu_custom_call.1} parent=1 // pred_check
      _
    $region27: #{tpu_custom_call.1} parent=1 // pred_check_branch
      %156 = sbr.rel (0) target = $region29
    $region28: #{tpu_custom_call.1} parent=1 // pred_region
      %157 = dma.done [#allocation4], 16
    $region29: #{tpu_custom_call.1} parent=1 // pred_fallthru
      _
    %158 = vsyncpa [#allocation4], 1

</llo_original>
